<compile_context>
chip_gen: v6e
topology: v6e:2x2x1
jax: 0.10.0
libtpu: 0.0.40
codegen_flags: <defaults>
</compile_context>

<pallas_src>
import functools

import jax
import jax.numpy as jnp
from jax.experimental import pallas as pl
from jax.experimental.pallas import tpu as pltpu


# ------------------------- model / problem sizes -------------------------
NB_LAYER = 2        # number of hidden Linear(H->H) layers in the ModuleList
HIDDEN = 32         # hidden_layer
IN_DIM = 2          # fc_int input features (t, r)
OUT_DIM = 1         # fc_out output features
N = 128             # batch size (number of collocation points) for the demo


# ------------------------------ the kernel -------------------------------
def _pinn_kernel(nb_layer, in_dim, hidden, compute_dtype,
                 x_ref,    # (in_dim, tile_n)            batch on lane axis
                 w_ref,    # (nb_layer+1, hidden, PAD)   packed weight slab
                 o_ref):   # (1, tile_n)                 lane-dense output
    # static lane offsets inside plane 0 of the slab
    off_b_int = in_dim
    off_w_out = in_dim + 1
    off_b_out = in_dim + 2

    # ---- first layer: K = in_dim = 2 contraction -> VPU broadcast FMAs ----
    b_int = w_ref[0, :, off_b_int:off_b_int + 1]            # (H, 1)
    pre = b_int + w_ref[0, :, 0:1] * x_ref[0:1, :]          # (H, tile_n)
    for d in range(1, in_dim):
        pre = pre + w_ref[0, :, d:d + 1] * x_ref[d:d + 1, :]
    h = jnp.tanh(pre)                                       # (H, tile_n) f32

    # ---- hidden stack: H x H matmuls on the MXU (static unroll) ----------
    for l in range(nb_layer):
        w = w_ref[1 + l, :, 0:hidden]                       # (H, H)
        b = w_ref[1 + l, :, hidden:hidden + 1]              # (H, 1)
        h = jnp.tanh(
            jnp.dot(w.astype(compute_dtype), h.astype(compute_dtype),
                    preferred_element_type=jnp.float32) + b)

    # ---- output layer: M = 1 -> VPU multiply + sublane reduce (no MXU) ----
    w_out = w_ref[0, :, off_w_out:off_w_out + 1]            # (H, 1)
    b_out = w_ref[0, 0:1, off_b_out:off_b_out + 1]          # (1, 1)
    z = jnp.sum(w_out * h, axis=0, keepdims=True) + b_out   # (1, tile_n)
    o_ref[...] = jax.nn.sigmoid(z)


# --------------------- one-time parameter packing ------------------------
def pack_params(params):
    """Pack all weights/biases into a single kernel-layout slab.

    Call this ONCE (outside the training/eval loop).  Plane 0 holds
    [w_int^T | b_int | w_out | b_out], planes 1..nb_layer hold
    [w_h[l]^T | b_h[l]].  Lane-padded to a multiple of 128.
    """
    in_dim, hidden = params["w_int"].shape
    nb_layer = params["w_h"].shape[0]
    pad = max(128, pl.cdiv(max(hidden + 1, in_dim + 3), 128) * 128)

    slab = jnp.zeros((nb_layer + 1, hidden, pad), jnp.float32)
    slab = slab.at[0, :, 0:in_dim].set(params["w_int"].T)
    slab = slab.at[0, :, in_dim].set(params["b_int"].reshape(hidden))
    slab = slab.at[0, :, in_dim + 1].set(params["w_out"].reshape(hidden))
    slab = slab.at[0, 0, in_dim + 2].set(params["b_out"].reshape(()))
    for l in range(nb_layer):
        slab = slab.at[l + 1, :, 0:hidden].set(params["w_h"][l].T)
        slab = slab.at[l + 1, :, hidden].set(params["b_h"][l].reshape(hidden))
    return slab


def _choose_tile_n(n):
    # <=512 lanes: the ceiling is vreg pressure, not VMEM (true on v5e/v6e/v7x).
    # >=2 grid steps once n >= 256 so v7x's two TensorCores both get work.
    if n <= 128:
        return 128
    if n <= 256:
        return 128
    if n <= 1024:
        return 256
    return 512


# ------------------------------ the wrapper ------------------------------
@functools.partial(jax.jit, static_argnames=("compute_dtype",))
def pinn_forward(x, slab, *, compute_dtype=jnp.float32):
    """x: (N, 2) float32.  slab: output of pack_params (kernel layout).

    Returns (N, 1) float32 — identical semantics to the nn.Module forward.
    """
    n, in_dim = x.shape
    nb_layer = slab.shape[0] - 1
    hidden = slab.shape[1]
    pad = slab.shape[2]

    tile_n = _choose_tile_n(n)
    n_pad = pl.cdiv(n, tile_n) * tile_n

    # Tiny layout op (8 bytes/point), fused into this executable under jit.
    # Callers with very large batches can supply x pre-transposed by adapting
    # this line; the kernel itself only ever sees the (in_dim, N) layout.
    x_t = x.T.astype(jnp.float32)                       # (in_dim, n)
    if n_pad != n:
        x_t = jnp.pad(x_t, ((0, 0), (0, n_pad - n)))    # zero-pad lanes

    kernel = functools.partial(_pinn_kernel, nb_layer, in_dim, hidden,
                               compute_dtype)

    out_t = pl.pallas_call(
        kernel,
        out_shape=jax.ShapeDtypeStruct((1, n_pad), jnp.float32),
        grid=(n_pad // tile_n,),
        in_specs=[
            # x tile, lane-dense
            pl.BlockSpec((in_dim, tile_n), lambda i: (0, i)),
            # single packed weight slab, resident across all grid steps
            pl.BlockSpec((nb_layer + 1, hidden, pad), lambda i: (0, 0, 0)),
        ],
        out_specs=pl.BlockSpec((1, tile_n), lambda i: (0, i)),
        compiler_params=pltpu.CompilerParams(
            dimension_semantics=("parallel",)),
    )(x_t, slab)

    # back to the PyTorch (N, 1) convention; drop padded rows
    return out_t.reshape(n_pad, 1)[:n]


# ------------------------- deterministic init ----------------------------
def init_params(key, nb_layer=NB_LAYER, hidden=HIDDEN):
    """Mimic PyTorch nn.Linear default init: U(-1/sqrt(fan_in), 1/sqrt(fan_in))."""
    keys = jax.random.split(key, 2 + 2 * nb_layer + 2)
    ki = iter(keys)

    def uni(k, shape, fan_in):
        bound = 1.0 / jnp.sqrt(jnp.float32(fan_in))
        return jax.random.uniform(k, shape, jnp.float32, -bound, bound)

    params = {
        "w_int": uni(next(ki), (IN_DIM, hidden), IN_DIM),
        "b_int": uni(next(ki), (1, hidden), IN_DIM),
        "w_h": jnp.stack(
            [uni(next(ki), (hidden, hidden), hidden) for _ in range(nb_layer)]),
        "b_h": jnp.stack(
            [uni(next(ki), (1, hidden), hidden) for _ in range(nb_layer)]),
        "w_out": uni(next(ki), (hidden, OUT_DIM), hidden),
        "b_out": uni(next(ki), (1, OUT_DIM), hidden),
    }
    # self.R (radius parameter) is not used in forward(); kept for parity.
    params["R"] = jnp.float32(1.0)
    return params


# ---------------------------- pure-JAX reference --------------------------
def pinn_forward_ref(x, params, nb_layer=NB_LAYER):
    h = jnp.tanh(x @ params["w_int"] + params["b_int"])
    for l in range(nb_layer):
        h = jnp.tanh(h @ params["w_h"][l] + params["b_h"][l])
    return jax.nn.sigmoid(h @ params["w_out"] + params["b_out"])


if __name__ == "__main__":
    key = jax.random.PRNGKey(0)
    kx, kx2, kp = jax.random.split(key, 3)

    params = init_params(kp)
    slab = pack_params(params)            # one-time layout prep (hoisted)

    # --- main check: N = 128 (single grid step, lane-dense) ---------------
    x = jax.random.uniform(kx, (N, IN_DIM), jnp.float32)
    out = jax.block_until_ready(pinn_forward(x, slab))
    ref = pinn_forward_ref(x, params)
    assert out.shape == (N, OUT_DIM)
    assert jnp.allclose(out, ref, atol=1e-5, rtol=1e-5), "mismatch vs reference (N=128)"

    # --- padding / multi-step path: N = 200 (not a multiple of 128) -------
    x2 = jax.random.uniform(kx2, (200, IN_DIM), jnp.float32)
    out2 = jax.block_until_ready(pinn_forward(x2, slab))
    ref2 = pinn_forward_ref(x2, params)
    assert out2.shape == (200, OUT_DIM)
    assert jnp.allclose(out2, ref2, atol=1e-5, rtol=1e-5), "mismatch vs reference (N=200)"

    print("KERNEL_OK")
</pallas_src>

<mosaic_0001>
module attributes {stable_mosaic.version = 11 : i64} {
  func.func @_pinn_kernel(%arg0: i32, %arg1: memref<2x128xf32, #tpu.memory_space<vmem>>, %arg2: memref<3x32x128xf32, #tpu.memory_space<vmem>>, %arg3: memref<1x128xf32, #tpu.memory_space<vmem>>) attributes {dimension_semantics = [#tpu.dimension_semantics<parallel>], iteration_bounds = array<i64: 1>, scalar_prefetch = 0 : i64, scratch_operands = 0 : i64, tpu.core_type = #tpu.core_type<tc>, window_params = [{transform_indices = @transform_0, window_bounds = array<i64: 2, 128>}, {pipeline_mode = #tpu.pipeline_mode<synchronous>, transform_indices = @transform_1, window_bounds = array<i64: 3, 32, 128>}, {transform_indices = @transform_2, window_bounds = array<i64: 1, 128>}]} {
    %c0 = arith.constant 0 : index
    %c0_0 = arith.constant 0 : index
    %c2 = arith.constant 2 : index
    %0 = vector.load %arg2[%c0, %c0_0, %c2] : memref<3x32x128xf32, #tpu.memory_space<vmem>>, vector<1x32x1xf32>
    %1 = vector.shape_cast %0 : vector<1x32x1xf32> to vector<32x1xf32>
    %c0_1 = arith.constant 0 : index
    %c0_2 = arith.constant 0 : index
    %c0_3 = arith.constant 0 : index
    %2 = vector.load %arg2[%c0_1, %c0_2, %c0_3] : memref<3x32x128xf32, #tpu.memory_space<vmem>>, vector<1x32x1xf32>
    %3 = vector.shape_cast %2 : vector<1x32x1xf32> to vector<32x1xf32>
    %c0_4 = arith.constant 0 : index
    %c0_5 = arith.constant 0 : index
    %4 = vector.load %arg1[%c0_4, %c0_5] : memref<2x128xf32, #tpu.memory_space<vmem>>, vector<1x128xf32>
    %5 = vector.broadcast %3 : vector<32x1xf32> to vector<32x128xf32>
    %6 = vector.broadcast %4 : vector<1x128xf32> to vector<32x128xf32>
    %7 = arith.mulf %5, %6 : vector<32x128xf32>
    %8 = vector.broadcast %1 : vector<32x1xf32> to vector<32x128xf32>
    %9 = arith.addf %8, %7 : vector<32x128xf32>
    %c0_6 = arith.constant 0 : index
    %c0_7 = arith.constant 0 : index
    %c1 = arith.constant 1 : index
    %10 = vector.load %arg2[%c0_6, %c0_7, %c1] : memref<3x32x128xf32, #tpu.memory_space<vmem>>, vector<1x32x1xf32>
    %11 = vector.shape_cast %10 : vector<1x32x1xf32> to vector<32x1xf32>
    %c1_8 = arith.constant 1 : index
    %c0_9 = arith.constant 0 : index
    %12 = vector.load %arg1[%c1_8, %c0_9] : memref<2x128xf32, #tpu.memory_space<vmem>>, vector<1x128xf32>
    %13 = vector.broadcast %11 : vector<32x1xf32> to vector<32x128xf32>
    %14 = vector.broadcast %12 : vector<1x128xf32> to vector<32x128xf32>
    %15 = arith.mulf %13, %14 : vector<32x128xf32>
    %16 = arith.addf %9, %15 : vector<32x128xf32>
    %17 = math.tanh %16 : vector<32x128xf32>
    %c1_10 = arith.constant 1 : index
    %c0_11 = arith.constant 0 : index
    %c0_12 = arith.constant 0 : index
    %18 = vector.load %arg2[%c1_10, %c0_11, %c0_12] : memref<3x32x128xf32, #tpu.memory_space<vmem>>, vector<1x32x32xf32>
    %19 = vector.shape_cast %18 : vector<1x32x32xf32> to vector<32x32xf32>
    %c1_13 = arith.constant 1 : index
    %c0_14 = arith.constant 0 : index
    %c32 = arith.constant 32 : index
    %20 = vector.load %arg2[%c1_13, %c0_14, %c32] : memref<3x32x128xf32, #tpu.memory_space<vmem>>, vector<1x32x1xf32>
    %21 = vector.shape_cast %20 : vector<1x32x1xf32> to vector<32x1xf32>
    %cst = arith.constant dense<0.000000e+00> : vector<32x128xf32>
    %22 = tpu.matmul %19, %17, %cst {dimension_numbers = #tpu.dot_dimension_numbers<[1], [0], [0], [1], [0, 0, 1, 1], [], []>} : vector<32x32xf32>, vector<32x128xf32>, vector<32x128xf32> -> vector<32x128xf32>
    %23 = vector.broadcast %21 : vector<32x1xf32> to vector<32x128xf32>
    %24 = arith.addf %22, %23 : vector<32x128xf32>
    %25 = math.tanh %24 : vector<32x128xf32>
    %c2_15 = arith.constant 2 : index
    %c0_16 = arith.constant 0 : index
    %c0_17 = arith.constant 0 : index
    %26 = vector.load %arg2[%c2_15, %c0_16, %c0_17] : memref<3x32x128xf32, #tpu.memory_space<vmem>>, vector<1x32x32xf32>
    %27 = vector.shape_cast %26 : vector<1x32x32xf32> to vector<32x32xf32>
    %c2_18 = arith.constant 2 : index
    %c0_19 = arith.constant 0 : index
    %c32_20 = arith.constant 32 : index
    %28 = vector.load %arg2[%c2_18, %c0_19, %c32_20] : memref<3x32x128xf32, #tpu.memory_space<vmem>>, vector<1x32x1xf32>
    %29 = vector.shape_cast %28 : vector<1x32x1xf32> to vector<32x1xf32>
    %cst_21 = arith.constant dense<0.000000e+00> : vector<32x128xf32>
    %30 = tpu.matmul %27, %25, %cst_21 {dimension_numbers = #tpu.dot_dimension_numbers<[1], [0], [0], [1], [0, 0, 1, 1], [], []>} : vector<32x32xf32>, vector<32x128xf32>, vector<32x128xf32> -> vector<32x128xf32>
    %31 = vector.broadcast %29 : vector<32x1xf32> to vector<32x128xf32>
    %32 = arith.addf %30, %31 : vector<32x128xf32>
    %33 = math.tanh %32 : vector<32x128xf32>
    %c0_22 = arith.constant 0 : index
    %c0_23 = arith.constant 0 : index
    %c3 = arith.constant 3 : index
    %34 = vector.load %arg2[%c0_22, %c0_23, %c3] : memref<3x32x128xf32, #tpu.memory_space<vmem>>, vector<1x32x1xf32>
    %35 = vector.shape_cast %34 : vector<1x32x1xf32> to vector<32x1xf32>
    %c0_24 = arith.constant 0 : index
    %c0_25 = arith.constant 0 : index
    %c4 = arith.constant 4 : index
    %36 = vector.load %arg2[%c0_24, %c0_25, %c4] : memref<3x32x128xf32, #tpu.memory_space<vmem>>, vector<1x1x1xf32>
    %37 = vector.shape_cast %36 : vector<1x1x1xf32> to vector<1x1xf32>
    %38 = vector.broadcast %35 : vector<32x1xf32> to vector<32x128xf32>
    %39 = arith.mulf %38, %33 : vector<32x128xf32>
    %cst_26 = arith.constant dense<0.000000e+00> : vector<128xf32>
    %40 = vector.multi_reduction <add>, %39, %cst_26 [0] : vector<32x128xf32> to vector<128xf32>
    %41 = vector.shape_cast %40 : vector<128xf32> to vector<1x128xf32>
    %42 = vector.broadcast %37 : vector<1x1xf32> to vector<1x128xf32>
    %43 = arith.addf %41, %42 : vector<1x128xf32>
    %44 = arith.negf %43 : vector<1x128xf32>
    %45 = math.exp %44 : vector<1x128xf32>
    %cst_27 = arith.constant 1.000000e+00 : f32
    %46 = vector.broadcast %cst_27 : f32 to vector<1x128xf32>
    %47 = arith.addf %46, %45 : vector<1x128xf32>
    %48 = arith.divf %46, %47 : vector<1x128xf32>
    %c0_28 = arith.constant 0 : index
    %c0_29 = arith.constant 0 : index
    %49 = vector.load %arg3[%c0_28, %c0_29] : memref<1x128xf32, #tpu.memory_space<vmem>>, vector<1x128xf32>
    tpu.vector_store %arg3[%c0_28, %c0_29], %48 {strides = array<i32>} : memref<1x128xf32, #tpu.memory_space<vmem>>, vector<1x128xf32>,
    return
  }
  func.func @transform_0(%arg0: i32) -> (i32, i32) {
    %c0_i32 = arith.constant 0 : i32
    %c0_i32_0 = arith.constant 0 : i32
    return %c0_i32, %arg0 : i32, i32
  }
  func.func @transform_1(%arg0: i32) -> (i32, i32, i32) {
    %c0_i32 = arith.constant 0 : i32
    %c0_i32_0 = arith.constant 0 : i32
    %c0_i32_1 = arith.constant 0 : i32
    %c0_i32_2 = arith.constant 0 : i32
    return %c0_i32, %c0_i32_0, %c0_i32_1 : i32, i32, i32
  }
  func.func @transform_2(%arg0: i32) -> (i32, i32) {
    %c0_i32 = arith.constant 0 : i32
    %c0_i32_0 = arith.constant 0 : i32
    return %c0_i32, %arg0 : i32, i32
  }
}

</mosaic_0001>

<llo_original>
// kernel: pinn_forward.1
$region0: #{pinn_forward.1}
  #allocation0 [shape = 'u32[]', space=smem, size = 0x4, offset = 0x4, fixed_abs, tag = 'smem constant byte address 0x4 - core index']
  #allocation1 [shape = 'u32[144,128]{1,0:T(1,128)}', space=vmem, size = 0x12000, scoped, tag = 'internal scratch']
  %s0 = inlined_call_operand.hbm [shape: f32[2,128], index: 0, kind: input, shape index: {}]
  %s1 = inlined_call_operand.hbm [shape: f32[3,32,128], index: 1, kind: input, shape index: {}]
  %s2 = inlined_call_operand.hbm [shape: f32[1,128], index: 2, kind: output, shape index: {}]
  %s3 = sld [smem:[#allocation0]]
  $region26: #{pinn_forward.1} parent=0
    _
  %s5 = ssub.s32 1, %s3
  %s6 = scalar_select 0, %s5, %s3
  $region1: #{pinn_forward.1} parent=0
    #allocation2 [shape = 'u8[1024]{0}', space=vmem, size = 0x400, scoped, tag = 'input window, operand 0, single buffered']
    #allocation3 [shape = 's32[1]{0}', space=sflag, size = 0x4, scoped, tag = 'scoped memory for pinn_forward.1']
    #allocation4 [shape = 's32[1]{0}', space=sflag, size = 0x4, scoped, tag = 'scoped memory for pinn_forward.1']
    #allocation5 [shape = 'u8[49152]{0}', space=vmem, size = 0xc000, scoped, tag = 'input window, operand 1, single buffered']
    #allocation6 [shape = 's32[1]{0}', space=sflag, size = 0x4, scoped, tag = 'scoped memory for pinn_forward.1']
    #allocation7 [shape = 'u8[512]{0}', space=vmem, size = 0x400, scoped, tag = 'output window, operand 0, single buffered']
    %7 = vsyncpa [#allocation3], 0
    %8 = vsyncpa [#allocation6], 0
    %9 = vsyncpa [#allocation4], 0
    // Predicated region
    $region2: #{pinn_forward.1} parent=1 // pred_check
      _
    $region3: #{pinn_forward.1} parent=1 // pred_check_branch
      %11 = sbr.rel (0) target = $region5
    $region4: #{pinn_forward.1} parent=1 // pred_region
      %s13 = ssub.s32 32, 32
      %14 = vsyncadd [#allocation3], %s13
      %s16 = sshll.u32 [#allocation2], 4
      %s17 = int_to_ptr.vmem [resolvable:$true] %s16
      %19 = dma.hbm_to_vmem [thread:$0]  %s0, 32, %s17, [#allocation3]
    $region5: #{pinn_forward.1} parent=1 // pred_fallthru
      _
    // Predicated region
    $region6: #{pinn_forward.1} parent=1 // pred_check
      _
    $region7: #{pinn_forward.1} parent=1 // pred_check_branch
      %21 = sbr.rel (0) target = $region9
    $region8: #{pinn_forward.1} parent=1 // pred_region
      %s23 = ssub.s32 1536, 1536
      %24 = vsyncadd [#allocation6], %s23
      %s25 = sshll.u32 [#allocation5], 4
      %s26 = int_to_ptr.vmem [resolvable:$true] %s25
      %31 = dma.hbm_to_vmem [thread:$0]  %s1, 1536, %s26, [#allocation6], 128, 128, 8
    $region9: #{pinn_forward.1} parent=1 // pred_fallthru
      _
    // Predicated region
    $region10: #{pinn_forward.1} parent=1 // pred_check
      _
    $region11: #{pinn_forward.1} parent=1 // pred_check_branch
      %33 = sbr.rel (0) target = $region13
    $region12: #{pinn_forward.1} parent=1 // pred_region
      %34 = dma.done [#allocation3], 32
    $region13: #{pinn_forward.1} parent=1 // pred_fallthru
      _
    // Predicated region
    $region14: #{pinn_forward.1} parent=1 // pred_check
      _
    $region15: #{pinn_forward.1} parent=1 // pred_check_branch
      %36 = sbr.rel (0) target = $region17
    $region16: #{pinn_forward.1} parent=1 // pred_region
      %37 = dma.done [#allocation6], 1536
    $region17: #{pinn_forward.1} parent=1 // pred_fallthru
      _
    %v38 = vld [vmem:[#allocation5] sm:$0xff]
    %v39 = vld [vmem:[#allocation5 + $0x8] sm:$0xff]
    %v40 = vld [vmem:[#allocation5 + $0x10] sm:$0xff]
    %v41 = vld [vmem:[#allocation5 + $0x18] sm:$0xff]
    %v42 = vld [vmem:[#allocation2] sm:$0x1]
    %44 = vset.pattern.permute.xlu0 0
    %45 = vperm.xlu0 %44, %v38
    %v46 = vpop.permute.xlu0 %45
    %49 = vset.pattern.permute.xlu0 0
    %50 = vperm.xlu0 %49, %v39
    %v51 = vpop.permute.xlu0 %50
    %54 = vset.pattern.permute.xlu0 0
    %55 = vperm.xlu0 %54, %v40
    %v56 = vpop.permute.xlu0 %55
    %59 = vset.pattern.permute.xlu0 0
    %60 = vperm.xlu0 %59, %v41
    %v61 = vpop.permute.xlu0 %60
    %v63 = vlaneseq
    %v64 = vshrl.u32 %v63, 7
    %v65 = vsub.s32 0, %v64
    %v66 = vrot.slane %v42, %v65
    %v67 = vmul.f32 %v46, %v66
    %v68 = vmul.f32 %v51, %v66
    %v69 = vmul.f32 %v56, %v66
    %v70 = vmul.f32 %v61, %v66
    %71 = vset.pattern.permute.xlu0 2
    %72 = vperm.xlu0 %71, %v38
    %v73 = vpop.permute.xlu0 %72
    %75 = vset.pattern.permute.xlu0 2
    %76 = vperm.xlu0 %75, %v39
    %v77 = vpop.permute.xlu0 %76
    %79 = vset.pattern.permute.xlu0 2
    %80 = vperm.xlu0 %79, %v40
    %v81 = vpop.permute.xlu0 %80
    %83 = vset.pattern.permute.xlu0 2
    %84 = vperm.xlu0 %83, %v41
    %v85 = vpop.permute.xlu0 %84
    %v87 = vadd.f32 %v73, %v67
    %v88 = vadd.f32 %v77, %v68
    %v89 = vadd.f32 %v81, %v69
    %v90 = vadd.f32 %v85, %v70
    %v91 = vld [vmem:[#allocation2 + $0x1] sm:$0x1]
    %92 = vset.pattern.permute.xlu0 1
    %93 = vperm.xlu0 %92, %v38
    %v94 = vpop.permute.xlu0 %93
    %96 = vset.pattern.permute.xlu0 1
    %97 = vperm.xlu0 %96, %v39
    %v98 = vpop.permute.xlu0 %97
    %100 = vset.pattern.permute.xlu0 1
    %101 = vperm.xlu0 %100, %v40
    %v102 = vpop.permute.xlu0 %101
    %104 = vset.pattern.permute.xlu0 1
    %105 = vperm.xlu0 %104, %v41
    %v106 = vpop.permute.xlu0 %105
    %v108 = vlaneseq
    %v109 = vshrl.u32 %v108, 7
    %v110 = vsub.s32 0, %v109
    %v111 = vrot.slane %v91, %v110
    %v112 = vmul.f32 %v94, %v111
    %v113 = vmul.f32 %v98, %v111
    %v114 = vmul.f32 %v102, %v111
    %v115 = vmul.f32 %v106, %v111
    %v116 = vadd.f32 %v87, %v112
    %v117 = vadd.f32 %v88, %v113
    %v118 = vadd.f32 %v89, %v114
    %v119 = vadd.f32 %v90, %v115
    %v120 = vtanh.pop %v116
    %v121 = vtanh.pop %v117
    %v122 = vtanh.pop %v118
    %v123 = vtanh.pop %v119
    %s124 = scalar_lea.vmem [#allocation5], 32
    %v125 = vld [vmem:[%s124] sm:$0xff]
    %v126 = vld [vmem:[%s124 + $0x8] sm:$0xff]
    %v127 = vld [vmem:[%s124 + $0x10] sm:$0xff]
    %v128 = vld [vmem:[%s124 + $0x18] sm:$0xff]
    %130 = vset.pattern.permute.xlu0 32
    %131 = vperm.xlu0 %130, %v125
    %v132 = vpop.permute.xlu0 %131
    %135 = vset.pattern.permute.xlu0 32
    %136 = vperm.xlu0 %135, %v126
    %v137 = vpop.permute.xlu0 %136
    %140 = vset.pattern.permute.xlu0 32
    %141 = vperm.xlu0 %140, %v127
    %v142 = vpop.permute.xlu0 %141
    %145 = vset.pattern.permute.xlu0 32
    %146 = vperm.xlu0 %145, %v128
    %v147 = vpop.permute.xlu0 %146
    %vm149 = vcmask 261120
    %v150 = vsel %vm149, %v125, 0
    %v152 = vsel %vm149, %v126, 0
    %v154 = vsel %vm149, %v127, 0
    %v156 = vsel %vm149, %v128, 0
    %158 = vmatprep.subr.mxu0 0.0
    %159 = vmatpush1.msra.mxu0 0.0
    %160 = vmatprep.subr.mxu0 0.0
    %161 = vmatpush1.msra.mxu0 0.0
    %162 = vmatprep.subr.mxu0 0.0
    %163 = vmatpush1.msra.mxu0 0.0
    %164 = vmatprep.subr.mxu0 0.0
    %165 = vmatpush1.msra.mxu0 0.0
    %166 = vmatprep.subr.mxu0 0.0
    %167 = vmatpush1.msra.mxu0 0.0
    %168 = vmatprep.subr.mxu0 0.0
    %169 = vmatpush1.msra.mxu0 0.0
    %170 = vmatprep.subr.mxu0 0.0
    %171 = vmatpush1.msra.mxu0 0.0
    %172 = vmatprep.subr.mxu0 0.0
    %173 = vmatpush1.msra.mxu0 0.0
    %174 = vmatprep.subr.mxu0 0.0
    %175 = vmatpush1.msra.mxu0 0.0
    %176 = vmatprep.subr.mxu0 0.0
    %177 = vmatpush1.msra.mxu0 0.0
    %178 = vmatprep.subr.mxu0 0.0
    %179 = vmatpush1.msra.mxu0 0.0
    %180 = vmatprep.subr.mxu0 0.0
    %181 = vmatpush1.msra.mxu0 0.0
    %182 = vmatprep.subr.mxu0 0.0
    %183 = vmatpush1.msra.mxu0 %v123
    %184 = vmatprep.subr.mxu0 0.0
    %185 = vmatpush1.msra.mxu0 %v122
    %186 = vmatprep.subr.mxu0 0.0
    %187 = vmatpush1.msra.mxu0 %v121
    %188 = vmatprep.subr.mxu0 0.0
    %189 = vmatpush1.msra.mxu0 %v120
    %190 = vmatprep.subr.mxu0 0.0
    %191 = vmatpush2.msra.mxu0 0.0
    %192 = vmatprep.subr.mxu0 0.0
    %193 = vmatpush2.msra.mxu0 0.0
    %194 = vmatprep.subr.mxu0 0.0
    %195 = vmatpush2.msra.mxu0 0.0
    %196 = vmatprep.subr.mxu0 0.0
    %197 = vmatpush2.msra.mxu0 0.0
    %198 = vmatprep.subr.mxu0 0.0
    %199 = vmatpush2.msra.mxu0 0.0
    %200 = vmatprep.subr.mxu0 0.0
    %201 = vmatpush2.msra.mxu0 0.0
    %202 = vmatprep.subr.mxu0 0.0
    %203 = vmatpush2.msra.mxu0 0.0
    %204 = vmatprep.subr.mxu0 0.0
    %205 = vmatpush2.msra.mxu0 0.0
    %206 = vmatprep.subr.mxu0 0.0
    %207 = vmatpush2.msra.mxu0 0.0
    %208 = vmatprep.subr.mxu0 0.0
    %209 = vmatpush2.msra.mxu0 0.0
    %210 = vmatprep.subr.mxu0 0.0
    %211 = vmatpush2.msra.mxu0 0.0
    %212 = vmatprep.subr.mxu0 0.0
    %213 = vmatpush2.msra.mxu0 0.0
    %214 = vmatprep.subr.mxu0 0.0
    %215 = vmatpush2.msra.mxu0 0.0
    %216 = vmatprep.subr.mxu0 0.0
    %217 = vmatpush2.msra.mxu0 0.0
    %218 = vmatprep.subr.mxu0 0.0
    %219 = vmatpush2.msra.mxu0 0.0
    %220 = vmatprep.subr.mxu0 0.0
    %221 = vmatpush2.msra.mxu0 0.0
    %222 = vmatprep.mubr.f32.mxu0 0.0
    %223 = vmatmul.mubr.f32.gmra.mxu0 %v150
    %v224 = vpop.f32.mrf.mxu0
    %v225 = vadd.f32 %v132, %v224
    %v226 = vpop.f32.mrf.mxu0
    %227 = vmatprep.mubr.f32.mxu0 0.0
    %228 = vmatmul.mubr.f32.gmra.mxu0 %v152
    %v229 = vpop.f32.mrf.mxu0
    %v230 = vadd.f32 %v137, %v229
    %v231 = vpop.f32.mrf.mxu0
    %232 = vmatprep.mubr.f32.mxu0 0.0
    %233 = vmatmul.mubr.f32.gmra.mxu0 %v154
    %v234 = vpop.f32.mrf.mxu0
    %v235 = vadd.f32 %v142, %v234
    %v236 = vpop.f32.mrf.mxu0
    %237 = vmatprep.mubr.f32.mxu0 0.0
    %238 = vmatmul.mubr.f32.gmra.mxu0 %v156
    %v239 = vpop.f32.mrf.mxu0
    %v240 = vadd.f32 %v147, %v239
    %v241 = vpop.f32.mrf.mxu0
    %242 = vdwg.mxu0
    %v243 = vtanh.pop %v225
    %v244 = vtanh.pop %v230
    %v245 = vtanh.pop %v235
    %v246 = vtanh.pop %v240
    %s247 = scalar_lea.vmem [#allocation5], 64
    %v248 = vld [vmem:[%s247] sm:$0xff]
    %v249 = vld [vmem:[%s247 + $0x8] sm:$0xff]
    %v250 = vld [vmem:[%s247 + $0x10] sm:$0xff]
    %v251 = vld [vmem:[%s247 + $0x18] sm:$0xff]
    %253 = vset.pattern.permute.xlu0 32
    %254 = vperm.xlu0 %253, %v248
    %v255 = vpop.permute.xlu0 %254
    %258 = vset.pattern.permute.xlu0 32
    %259 = vperm.xlu0 %258, %v249
    %v260 = vpop.permute.xlu0 %259
    %263 = vset.pattern.permute.xlu0 32
    %264 = vperm.xlu0 %263, %v250
    %v265 = vpop.permute.xlu0 %264
    %268 = vset.pattern.permute.xlu0 32
    %269 = vperm.xlu0 %268, %v251
    %v270 = vpop.permute.xlu0 %269
    %v272 = vsel %vm149, %v248, 0
    %v274 = vsel %vm149, %v249, 0
    %v276 = vsel %vm149, %v250, 0
    %v278 = vsel %vm149, %v251, 0
    %280 = vmatprep.subr.mxu0 0.0
    %281 = vmatpush1.msra.mxu0 0.0
    %282 = vmatprep.subr.mxu0 0.0
    %283 = vmatpush1.msra.mxu0 0.0
    %284 = vmatprep.subr.mxu0 0.0
    %285 = vmatpush1.msra.mxu0 0.0
    %286 = vmatprep.subr.mxu0 0.0
    %287 = vmatpush1.msra.mxu0 0.0
    %288 = vmatprep.subr.mxu0 0.0
    %289 = vmatpush1.msra.mxu0 0.0
    %290 = vmatprep.subr.mxu0 0.0
    %291 = vmatpush1.msra.mxu0 0.0
    %292 = vmatprep.subr.mxu0 0.0
    %293 = vmatpush1.msra.mxu0 0.0
    %294 = vmatprep.subr.mxu0 0.0
    %295 = vmatpush1.msra.mxu0 0.0
    %296 = vmatprep.subr.mxu0 0.0
    %297 = vmatpush1.msra.mxu0 0.0
    %298 = vmatprep.subr.mxu0 0.0
    %299 = vmatpush1.msra.mxu0 0.0
    %300 = vmatprep.subr.mxu0 0.0
    %301 = vmatpush1.msra.mxu0 0.0
    %302 = vmatprep.subr.mxu0 0.0
    %303 = vmatpush1.msra.mxu0 0.0
    %304 = vmatprep.subr.mxu0 0.0
    %305 = vmatpush1.msra.mxu0 %v246
    %306 = vmatprep.subr.mxu0 0.0
    %307 = vmatpush1.msra.mxu0 %v245
    %308 = vmatprep.subr.mxu0 0.0
    %309 = vmatpush1.msra.mxu0 %v244
    %310 = vmatprep.subr.mxu0 0.0
    %311 = vmatpush1.msra.mxu0 %v243
    %312 = vmatprep.subr.mxu0 0.0
    %313 = vmatpush2.msra.mxu0 0.0
    %314 = vmatprep.subr.mxu0 0.0
    %315 = vmatpush2.msra.mxu0 0.0
    %316 = vmatprep.subr.mxu0 0.0
    %317 = vmatpush2.msra.mxu0 0.0
    %318 = vmatprep.subr.mxu0 0.0
    %319 = vmatpush2.msra.mxu0 0.0
    %320 = vmatprep.subr.mxu0 0.0
    %321 = vmatpush2.msra.mxu0 0.0
    %322 = vmatprep.subr.mxu0 0.0
    %323 = vmatpush2.msra.mxu0 0.0
    %324 = vmatprep.subr.mxu0 0.0
    %325 = vmatpush2.msra.mxu0 0.0
    %326 = vmatprep.subr.mxu0 0.0
    %327 = vmatpush2.msra.mxu0 0.0
    %328 = vmatprep.subr.mxu0 0.0
    %329 = vmatpush2.msra.mxu0 0.0
    %330 = vmatprep.subr.mxu0 0.0
    %331 = vmatpush2.msra.mxu0 0.0
    %332 = vmatprep.subr.mxu0 0.0
    %333 = vmatpush2.msra.mxu0 0.0
    %334 = vmatprep.subr.mxu0 0.0
    %335 = vmatpush2.msra.mxu0 0.0
    %336 = vmatprep.subr.mxu0 0.0
    %337 = vmatpush2.msra.mxu0 0.0
    %338 = vmatprep.subr.mxu0 0.0
    %339 = vmatpush2.msra.mxu0 0.0
    %340 = vmatprep.subr.mxu0 0.0
    %341 = vmatpush2.msra.mxu0 0.0
    %342 = vmatprep.subr.mxu0 0.0
    %343 = vmatpush2.msra.mxu0 0.0
    %344 = vmatprep.mubr.f32.mxu0 0.0
    %345 = vmatmul.mubr.f32.gmra.mxu0 %v272
    %v346 = vpop.f32.mrf.mxu0
    %v347 = vadd.f32 %v255, %v346
    %v348 = vpop.f32.mrf.mxu0
    %349 = vmatprep.mubr.f32.mxu0 0.0
    %350 = vmatmul.mubr.f32.gmra.mxu0 %v274
    %v351 = vpop.f32.mrf.mxu0
    %v352 = vadd.f32 %v260, %v351
    %v353 = vpop.f32.mrf.mxu0
    %354 = vmatprep.mubr.f32.mxu0 0.0
    %355 = vmatmul.mubr.f32.gmra.mxu0 %v276
    %v356 = vpop.f32.mrf.mxu0
    %v357 = vadd.f32 %v265, %v356
    %v358 = vpop.f32.mrf.mxu0
    %359 = vmatprep.mubr.f32.mxu0 0.0
    %360 = vmatmul.mubr.f32.gmra.mxu0 %v278
    %v361 = vpop.f32.mrf.mxu0
    %v362 = vadd.f32 %v270, %v361
    %v363 = vpop.f32.mrf.mxu0
    %364 = vdwg.mxu0
    %v365 = vtanh.pop %v347
    %v366 = vtanh.pop %v352
    %v367 = vtanh.pop %v357
    %v368 = vtanh.pop %v362
    %v369 = vld [vmem:[#allocation5] sm:$0x1]
    %370 = vset.pattern.permute.xlu0 3
    %371 = vperm.xlu0 %370, %v38
    %v372 = vpop.permute.xlu0 %371
    %374 = vset.pattern.permute.xlu0 3
    %375 = vperm.xlu0 %374, %v39
    %v376 = vpop.permute.xlu0 %375
    %378 = vset.pattern.permute.xlu0 3
    %379 = vperm.xlu0 %378, %v40
    %v380 = vpop.permute.xlu0 %379
    %382 = vset.pattern.permute.xlu0 3
    %383 = vperm.xlu0 %382, %v41
    %v384 = vpop.permute.xlu0 %383
    %v386 = vmul.f32 %v372, %v365
    %v387 = vmul.f32 %v376, %v366
    %v388 = vmul.f32 %v380, %v367
    %v389 = vmul.f32 %v384, %v368
    %v390 = vadd.f32 %v386, %v387
    %v391 = vadd.f32 %v390, %v388
    %v392 = vadd.f32 %v391, %v389
    %v393 = vrot.slane %v392, 4
    %v394 = vadd.f32 %v392, %v393
    %v395 = vrot.slane %v394, 2
    %v396 = vadd.f32 %v394, %v395
    %v397 = vrot.slane %v396, 1
    %v398 = vadd.f32 %v396, %v397
    %400 = vset.pattern.permute.xlu0 4
    %401 = vperm.xlu0 %400, %v369
    %v402 = vpop.permute.xlu0 %401
    %v404 = vadd.f32 %v398, %v402
    %v405 = vxor.u32 %v404, 2147483648
    %v406 = vmul.f32 %v405, 1.442695
    %v407 = vpow.pop %v406
    %v408 = vadd.f32 %v407, 1.0
    %v409 = vrcp.pop %v408
    %v410 = vmul.f32 1.0, %v409
    %411 = vst [vmem:[#allocation7] sm:$0x1] %v410
    // Predicated region
    $region18: #{pinn_forward.1} parent=1 // pred_check
      _
    $region19: #{pinn_forward.1} parent=1 // pred_check_branch
      %413 = sbr.rel (0) target = $region21
    $region20: #{pinn_forward.1} parent=1 // pred_region
      %s415 = ssub.s32 16, 16
      %416 = vsyncadd [#allocation4], %s415
      %s418 = sshll.u32 [#allocation7], 4
      %s419 = int_to_ptr.vmem [resolvable:$true] %s418
      %421 = dma.vmem_to_hbm [thread:$0]  %s419, 16, %s2, [#allocation4]
    $region21: #{pinn_forward.1} parent=1 // pred_fallthru
      _
    // Predicated region
    $region22: #{pinn_forward.1} parent=1 // pred_check
      _
    $region23: #{pinn_forward.1} parent=1 // pred_check_branch
      %423 = sbr.rel (0) target = $region25
    $region24: #{pinn_forward.1} parent=1 // pred_region
      %424 = dma.done [#allocation4], 16
    $region25: #{pinn_forward.1} parent=1 // pred_fallthru
      _
    %425 = vsyncpa [#allocation3], 1
    %426 = vsyncpa [#allocation6], 1
    %427 = vsyncpa [#allocation4], 1

</llo_original>
